<compile_context>
chip_gen: v5e
topology: v5e:2x2
jax: 0.10.0
libtpu: 0.0.40
codegen_flags: <defaults>
</compile_context>

<pallas_src>
import functools

import jax
import jax.numpy as jnp
from jax.experimental import pallas as pl
from jax.experimental.pallas import tpu as pltpu

_N_DMA_SLOTS = 8   # rotating DMA-semaphore pool (row copies are all equal size)


def _embed_kernel(seed_ref, ids_ref, word_hbm, pos_ref, out_ref,
                  gather_ref, dma_sems, *,
                  dropout_p, tile, hidden, pos_repeat, n_slots):
    """One grid step: gather `tile` word rows, add pos block, dropout, store."""
    t = pl.program_id(0)
    base = t * tile                                   # first flat token of tile

    # ---- gather word-embedding rows HBM -> VMEM: all row DMAs in flight -----
    @pl.loop(0, tile)
    def _start(r):
        idx = ids_ref[base + r]
        pltpu.make_async_copy(word_hbm.at[pl.ds(idx, 1), :],
                              gather_ref.at[pl.ds(r, 1), :],
                              dma_sems.at[r % n_slots]).start()

    @pl.loop(0, tile)
    def _drain(r):
        # Equal-size row copies share semaphore slots; one wait per start.
        pltpu.make_async_copy(word_hbm.at[pl.ds(0, 1), :],
                              gather_ref.at[pl.ds(0, 1), :],
                              dma_sems.at[r % n_slots]).wait()

    # ---- word + position, full (tile, H) block on the VPU -------------------
    words = gather_ref[...].astype(jnp.float32)               # (tile, H)
    pos = pos_ref[...].astype(jnp.float32)                    # (ps, H)
    if pos_repeat > 1:                                         # tile spans several sequences
        pos = jnp.concatenate([pos] * pos_repeat, axis=0)      # (tile, H)
    emb = words + pos

    # ---- fused inverted dropout over the whole tile --------------------------
    if dropout_p > 0.0:
        row = jax.lax.broadcasted_iota(jnp.int32, (tile, hidden), 0)
        lane = jax.lax.broadcasted_iota(jnp.int32, (tile, hidden), 1)
        tok = base.astype(jnp.uint32) + row.astype(jnp.uint32)    # global token
        ctr = tok * jnp.uint32(hidden) + lane.astype(jnp.uint32)  # element id
        seed_u = ((seed_ref[0].astype(jnp.uint32) * jnp.uint32(0x9E3779B9))
                  ^ jnp.uint32(0x85EBCA6B))
        x = ctr ^ seed_u                       # lowbias32-style integer mixer
        x = x ^ (x >> 16)
        x = x * jnp.uint32(0x7FEB352D)
        x = x ^ (x >> 15)
        x = x * jnp.uint32(0x846CA68B)
        x = x ^ (x >> 16)
        u31 = (x >> 1).astype(jnp.int32)       # uniform in [0, 2**31)
        thresh = jnp.int32(min(int(round(dropout_p * 2.0 ** 31)), 2 ** 31 - 1))
        keep = (u31 >= thresh).astype(jnp.float32)             # P(keep) = 1 - p
        emb = emb * (keep * jnp.float32(1.0 / (1.0 - dropout_p)))

    out_ref[...] = emb.astype(out_ref.dtype)   # one unmasked full-tile store


def _pick_tile(n_tokens, seq_len, cap_tokens):
    """Token-tile size: multiple of 8, VMEM-capped, preferably commensurate
    with the sequence length (dense position block) and small enough that the
    grid has >= 2 steps (feeds both TensorCores on megacore parts)."""
    cap = max(8, (cap_tokens // 8) * 8)
    target = min(cap, max(8, ((n_tokens // 2) // 8) * 8))
    aligned = [c for c in range(8, cap + 1, 8)
               if seq_len % c == 0 or c % seq_len == 0]
    le = [c for c in aligned if c <= target]
    if le:
        return max(le)
    if aligned:
        return min(aligned)
    return target           # unaligned fallback (wrapper materializes pos rows)


def vocab_parallel_embedding(input_ids, word_w, pos_w, *, dropout_p, seed=0):
    """Forward pass of VocabParallelEmbedding (single tensor-parallel rank)."""
    assert 0.0 <= dropout_p < 1.0, "dropout_p must be in [0, 1)"
    B, S = input_ids.shape
    V, H = word_w.shape
    assert pos_w.shape[0] >= S and pos_w.shape[1] == H
    N = B * S
    out_dtype = word_w.dtype

    # Guard out-of-range ids (torch would raise; we clamp to avoid OOB DMAs).
    ids = jnp.clip(input_ids.reshape(N).astype(jnp.int32), 0, V - 1)

    # ---- tile selection (VMEM-capped, multiple of 8) -------------------------
    out_b = jnp.dtype(out_dtype).itemsize
    w_b = jnp.dtype(word_w.dtype).itemsize
    p_b = jnp.dtype(pos_w.dtype).itemsize
    per_tok_bytes = H * (2 * out_b + w_b + 2 * p_b)   # dbl-buf out + scratch + pos
    cap = int(min(2048, max(8, (24 * 2 ** 20) // max(per_tok_bytes, 1))))
    tile = _pick_tile(N, S, cap)

    n_pad = pl.cdiv(N, tile) * tile
    if n_pad != N:
        ids = jnp.pad(ids, (0, n_pad - N))            # padded rows sliced off below
    grid = (n_pad // tile,)

    # ---- position embeddings: one dense block per grid step ------------------
    pos_used = pos_w[:S]
    if S % tile == 0:                                 # contiguous (tile, H) slab
        pos_in, ps, pos_repeat = pos_used, tile, 1
        n_pos_blocks = S // tile
        pos_map = lambda t, *_: (t % n_pos_blocks, 0)
    elif tile % S == 0:                               # whole (S, H) table, grid-resident
        pos_in, ps, pos_repeat = pos_used, S, tile // S
        pos_map = lambda t, *_: (0, 0)
    else:                                             # rare unaligned fallback
        pos_in = jnp.take(pos_used, jnp.arange(n_pad) % S, axis=0)
        ps, pos_repeat = tile, 1
        pos_map = lambda t, *_: (t, 0)

    seed_arr = jnp.asarray([seed], dtype=jnp.int32)

    block_bytes = 2 * tile * H * out_b + tile * H * w_b + 2 * ps * H * p_b
    vmem_limit = int(min(60 * 2 ** 20, max(32 * 2 ** 20, 2 * block_bytes)))

    kernel = functools.partial(
        _embed_kernel, dropout_p=float(dropout_p), tile=tile, hidden=H,
        pos_repeat=pos_repeat, n_slots=_N_DMA_SLOTS)

    out = pl.pallas_call(
        kernel,
        out_shape=jax.ShapeDtypeStruct((n_pad, H), out_dtype),
        grid_spec=pltpu.PrefetchScalarGridSpec(
            num_scalar_prefetch=2,                    # (seed, ids) -> SMEM
            grid=grid,
            in_specs=[
                pl.BlockSpec(memory_space=pl.ANY),    # word table stays in HBM
                pl.BlockSpec((ps, H), pos_map),       # dense position block
            ],
            out_specs=pl.BlockSpec((tile, H), lambda t, *_: (t, 0)),
            scratch_shapes=[
                pltpu.VMEM((tile, H), word_w.dtype),  # gathered word rows
                pltpu.SemaphoreType.DMA((_N_DMA_SLOTS,)),
            ],
        ),
        compiler_params=pltpu.CompilerParams(
            dimension_semantics=("parallel",),
            vmem_limit_bytes=vmem_limit),
    )(seed_arr, ids, word_w, pos_in)

    return out[:N].reshape(B, S, H)


def reference_no_dropout(input_ids, word_w, pos_w):
    """Pure-JAX reference of the forward pass with dropout disabled."""
    B, S = input_ids.shape
    words = jnp.take(word_w, input_ids, axis=0)                # (B, S, H)
    posemb = jnp.take(pos_w, jnp.arange(S), axis=0)[None]      # (1, S, H)
    return (words.astype(jnp.float32) + posemb.astype(jnp.float32))


if __name__ == "__main__":
    HIDDEN = 128          # hidden_size
    VOCAB = 256           # vocab_size (single partition, tp=1)
    MAX_SEQ = 128         # max_sequence_length
    DROPOUT = 0.1         # embedding_dropout_prob
    BATCH, SEQ = 2, 8

    key = jax.random.PRNGKey(0)
    k_word, k_pos, k_ids = jax.random.split(key, 3)

    # word_embeddings: init.uniform_(-1, 1); position_embeddings: Normal(0, 1)
    word_w = jax.random.uniform(k_word, (VOCAB, HIDDEN), jnp.float32,
                                minval=-1.0, maxval=1.0)
    pos_w = jax.random.normal(k_pos, (MAX_SEQ, HIDDEN), jnp.float32)
    input_ids = jax.random.randint(k_ids, (BATCH, SEQ), 0, VOCAB, jnp.int32)

    ref = reference_no_dropout(input_ids, word_w, pos_w)

    # Dropout disabled -> must match the pure-JAX reference exactly.
    out0 = vocab_parallel_embedding(input_ids, word_w, pos_w,
                                    dropout_p=0.0, seed=0)
    jax.block_until_ready(out0)
    assert out0.shape == (BATCH, SEQ, HIDDEN)
    assert out0.dtype == jnp.float32
    assert jnp.allclose(out0, ref, atol=1e-5, rtol=1e-5)

    # Training mode: every element is either dropped (0) or scaled by 1/(1-p).
    out = vocab_parallel_embedding(input_ids, word_w, pos_w,
                                   dropout_p=DROPOUT, seed=1234)
    jax.block_until_ready(out)
    assert out.shape == (BATCH, SEQ, HIDDEN)
    scale = 1.0 / (1.0 - DROPOUT)
    is_zero = jnp.isclose(out, 0.0, atol=1e-6)
    is_scaled = jnp.isclose(out, ref * scale, atol=1e-4, rtol=1e-4)
    assert bool(jnp.all(is_zero | is_scaled))
    drop_frac = float(jnp.mean(is_zero.astype(jnp.float32)))
    assert 0.02 < drop_frac < 0.25, drop_frac

    print("KERNEL_OK")
</pallas_src>

<mosaic_0001>
module attributes {stable_mosaic.version = 11 : i64} {
  func.func @_embed_kernel(%arg0: i32, %arg1: memref<1xi32, #tpu.memory_space<smem>>, %arg2: memref<16xi32, #tpu.memory_space<smem>>, %arg3: memref<256x128xf32, #tpu.memory_space<any>>, %arg4: memref<8x128xf32, #tpu.memory_space<vmem>>, %arg5: memref<8x128xf32, #tpu.memory_space<vmem>>, %arg6: memref<8x128xf32, #tpu.memory_space<vmem>>, %arg7: memref<8x!tpu.dma_semaphore, #tpu.memory_space<semaphore_mem>>) attributes {dimension_semantics = [#tpu.dimension_semantics<parallel>], iteration_bounds = array<i64: 2>, scalar_prefetch = 2 : i64, scratch_operands = 2 : i64, tpu.core_type = #tpu.core_type<tc>, window_params = [{}, {transform_indices = @transform_1, window_bounds = array<i64: 8, 128>}, {transform_indices = @transform_2, window_bounds = array<i64: 8, 128>}]} {
    %c8_i32 = arith.constant 8 : i32
    %0 = arith.muli %arg0, %c8_i32 : i32
    %c0_i32 = arith.constant 0 : i32
    %c8_i32_0 = arith.constant 8 : i32
    %1 = arith.addi %c0_i32, %c8_i32_0 : i32
    %c1_i32 = arith.constant 1 : i32
    scf.for %arg8 = %c0_i32 to %1 step %c1_i32  : i32 {
      %c1_i32_11 = arith.constant 1 : i32
      %7 = arith.muli %arg8, %c1_i32_11 : i32
      %c0_i32_12 = arith.constant 0 : i32
      %8 = arith.addi %c0_i32_12, %7 : i32
      %9 = arith.addi %0, %8 : i32
      %10 = arith.index_cast %9 : i32 to index
      %11 = memref.load %arg2[%10] : memref<16xi32, #tpu.memory_space<smem>>
      %c8_i32_13 = arith.constant 8 : i32
      %c0_i32_14 = arith.constant 0 : i32
      %12 = arith.cmpi eq, %c8_i32_13, %c0_i32_14 : i32
      %c1_i32_15 = arith.constant 1 : i32
      %13 = arith.select %12, %c1_i32_15, %c8_i32_13 : i32
      %14 = arith.remsi %8, %13 : i32
      %c0_i32_16 = arith.constant 0 : i32
      %15 = arith.cmpi ne, %14, %c0_i32_16 : i32
      %c0_i32_17 = arith.constant 0 : i32
      %16 = arith.cmpi slt, %14, %c0_i32_17 : i32
      %c0_i32_18 = arith.constant 0 : i32
      %17 = arith.cmpi slt, %13, %c0_i32_18 : i32
      %18 = arith.xori %16, %17 : i1
      %19 = arith.andi %18, %15 : i1
      %20 = arith.addi %14, %13 : i32
      %21 = arith.select %19, %20, %14 : i32
      %c0_i32_19 = arith.constant 0 : i32
      %22 = tpu.memref_slice %arg3[%11, %c0_i32_19] : memref<256x128xf32, #tpu.memory_space<any>> -> memref<1x128xf32, #tpu.memory_space<any>>
      %c0_i32_20 = arith.constant 0 : i32
      %23 = tpu.memref_slice %arg6[%8, %c0_i32_20] : memref<8x128xf32, #tpu.memory_space<vmem>> -> memref<1x128xf32, #tpu.memory_space<vmem>>
      %24 = tpu.memref_slice %arg7[%21] : memref<8x!tpu.dma_semaphore, #tpu.memory_space<semaphore_mem>> -> memref<1x!tpu.dma_semaphore, #tpu.memory_space<semaphore_mem>>
      %25 = tpu.memref_squeeze %24 : memref<1x!tpu.dma_semaphore, #tpu.memory_space<semaphore_mem>> -> memref<!tpu.dma_semaphore, #tpu.memory_space<semaphore_mem>>
      tpu.enqueue_dma source(%22 : memref<1x128xf32, #tpu.memory_space<any>>) target(%23 : memref<1x128xf32, #tpu.memory_space<vmem>>) target_semaphore(%25 : memref<!tpu.dma_semaphore, #tpu.memory_space<semaphore_mem>>)
    }
    %c8_i32_1 = arith.constant 8 : i32
    %c0_i32_2 = arith.constant 0 : i32
    %c8_i32_3 = arith.constant 8 : i32
    %2 = arith.addi %c0_i32_2, %c8_i32_3 : i32
    %c1_i32_4 = arith.constant 1 : i32
    scf.for %arg8 = %c0_i32_2 to %2 step %c1_i32_4  : i32 {
      %c1_i32_11 = arith.constant 1 : i32
      %7 = arith.muli %arg8, %c1_i32_11 : i32
      %c0_i32_12 = arith.constant 0 : i32
      %8 = arith.addi %c0_i32_12, %7 : i32
      %c8_i32_13 = arith.constant 8 : i32
      %c0_i32_14 = arith.constant 0 : i32
      %9 = arith.cmpi eq, %c8_i32_13, %c0_i32_14 : i32
      %c1_i32_15 = arith.constant 1 : i32
      %10 = arith.select %9, %c1_i32_15, %c8_i32_13 : i32
      %11 = arith.remsi %8, %10 : i32
      %c0_i32_16 = arith.constant 0 : i32
      %12 = arith.cmpi ne, %11, %c0_i32_16 : i32
      %c0_i32_17 = arith.constant 0 : i32
      %13 = arith.cmpi slt, %11, %c0_i32_17 : i32
      %c0_i32_18 = arith.constant 0 : i32
      %14 = arith.cmpi slt, %10, %c0_i32_18 : i32
      %15 = arith.xori %13, %14 : i1
      %16 = arith.andi %15, %12 : i1
      %17 = arith.addi %11, %10 : i32
      %18 = arith.select %16, %17, %11 : i32
      %c0_i32_19 = arith.constant 0 : i32
      %c0_i32_20 = arith.constant 0 : i32
      %19 = tpu.memref_slice %arg3[%c0_i32_19, %c0_i32_20] : memref<256x128xf32, #tpu.memory_space<any>> -> memref<1x128xf32, #tpu.memory_space<any>>
      %c0_i32_21 = arith.constant 0 : i32
      %c0_i32_22 = arith.constant 0 : i32
      %20 = tpu.memref_slice %arg6[%c0_i32_21, %c0_i32_22] : memref<8x128xf32, #tpu.memory_space<vmem>> -> memref<1x128xf32, #tpu.memory_space<vmem>>
      %21 = tpu.memref_slice %arg7[%18] : memref<8x!tpu.dma_semaphore, #tpu.memory_space<semaphore_mem>> -> memref<1x!tpu.dma_semaphore, #tpu.memory_space<semaphore_mem>>
      %22 = tpu.memref_squeeze %21 : memref<1x!tpu.dma_semaphore, #tpu.memory_space<semaphore_mem>> -> memref<!tpu.dma_semaphore, #tpu.memory_space<semaphore_mem>>
      tpu.wait_dma2 semaphore(%22 : memref<!tpu.dma_semaphore, #tpu.memory_space<semaphore_mem>>) src(%19 : memref<1x128xf32, #tpu.memory_space<any>>) dst(%20 : memref<1x128xf32, #tpu.memory_space<vmem>>)
    }
    %c8_i32_5 = arith.constant 8 : i32
    %c0 = arith.constant 0 : index
    %c0_6 = arith.constant 0 : index
    %3 = vector.load %arg6[%c0, %c0_6] : memref<8x128xf32, #tpu.memory_space<vmem>>, vector<8x128xf32>
    %c0_7 = arith.constant 0 : index
    %c0_8 = arith.constant 0 : index
    %4 = vector.load %arg4[%c0_7, %c0_8] : memref<8x128xf32, #tpu.memory_space<vmem>>, vector<8x128xf32>
    %5 = arith.addf %3, %4 : vector<8x128xf32>
    %c0_9 = arith.constant 0 : index
    %c0_10 = arith.constant 0 : index
    %6 = vector.load %arg5[%c0_9, %c0_10] : memref<8x128xf32, #tpu.memory_space<vmem>>, vector<8x128xf32>
    tpu.vector_store %arg5[%c0_9, %c0_10], %5 {strides = array<i32>} : memref<8x128xf32, #tpu.memory_space<vmem>>, vector<8x128xf32>,
    return
  }
  func.func @transform_1(%arg0: i32, %arg1: memref<1xi32, #tpu.memory_space<smem>>, %arg2: memref<16xi32, #tpu.memory_space<smem>>) -> (i32, i32) {
    %c1_i32 = arith.constant 1 : i32
    %c0_i32 = arith.constant 0 : i32
    %0 = arith.cmpi eq, %c1_i32, %c0_i32 : i32
    %c1_i32_0 = arith.constant 1 : i32
    %1 = arith.select %0, %c1_i32_0, %c1_i32 : i32
    %2 = arith.remsi %arg0, %1 : i32
    %c0_i32_1 = arith.constant 0 : i32
    %3 = arith.cmpi ne, %2, %c0_i32_1 : i32
    %c0_i32_2 = arith.constant 0 : i32
    %4 = arith.cmpi slt, %2, %c0_i32_2 : i32
    %c0_i32_3 = arith.constant 0 : i32
    %5 = arith.cmpi slt, %1, %c0_i32_3 : i32
    %6 = arith.xori %4, %5 : i1
    %7 = arith.andi %6, %3 : i1
    %8 = arith.addi %2, %1 : i32
    %9 = arith.select %7, %8, %2 : i32
    %c0_i32_4 = arith.constant 0 : i32
    %c0_i32_5 = arith.constant 0 : i32
    return %9, %c0_i32_4 : i32, i32
  }
  func.func @transform_2(%arg0: i32, %arg1: memref<1xi32, #tpu.memory_space<smem>>, %arg2: memref<16xi32, #tpu.memory_space<smem>>) -> (i32, i32) {
    %c0_i32 = arith.constant 0 : i32
    %c0_i32_0 = arith.constant 0 : i32
    return %arg0, %c0_i32 : i32, i32
  }
}

</mosaic_0001>

<llo_original>
// kernel: tpu_custom_call.1
$region0: #{tpu_custom_call.1}
  #allocation0 [shape = 'u32[]', space=smem, size = 0x4, offset = 0x4, fixed_abs, tag = 'smem constant byte address 0x4 - core index']
  #allocation1 [shape = 'u32[72,128]{1,0:T(1,128)}', space=vmem, size = 0x9000, scoped, tag = 'internal scratch']
  #allocation2 [shape = 'f32[8,128]{1,0:T(8,128)}', space=vmem, size = 0x1000, scoped, tag = 'scratch operand']
  #allocation3 [shape = 's32[8]{0}', space=sflag, size = 0x20, scoped, tag = 'scratch operand']
  #allocation4 [shape = 's32[1]{0}', space=sflag, size = 0x4, scoped, tag = 'scoped memory for tpu_custom_call.1']
  #allocation5 [shape = 's32[1]{0:T(128)S(6)}', space=smem, size = 0x200, scoped, tag = 'prefetched SMEM operand 0']
  #allocation6 [shape = 'u8[512]{0}', space=smem, size = 0x200, scoped, tag = 'prefetched SMEM operand 1']
  #allocation11 [shape = 's32[]', space=sflag, size = 0x4, offset = 0, fixed_abs, tag = 'sflag constant byte address 0x0 - dummy sync flag']
  #allocation12 [shape = 's32[]', space=sflag, size = 0x4, offset = 0, fixed_abs, tag = 'sflag constant byte address 0x0 - dummy sync flag']
  #allocation13 [shape = 'u32[]', space=smem, size = 0x4, offset = 0x44, fixed_abs, tag = 'smem constant byte address 0x44 - assertion arg 0']
  #allocation14 [shape = 'u32[]', space=smem, size = 0x4, offset = 0x48, fixed_abs, tag = 'smem constant byte address 0x48 - assertion arg 1']
  %s0 = inlined_call_operand.<no memory space> [shape: s32[1], index: 0, kind: input, shape index: {}]
  %s1 = inlined_call_operand.vmem [shape: s32[16], index: 1, kind: input, shape index: {}]
  %s2 = inlined_call_operand.hbm [shape: f32[256,128], index: 2, kind: input, shape index: {}]
  %s3 = inlined_call_operand.hbm [shape: f32[8,128], index: 3, kind: input, shape index: {}]
  %s4 = inlined_call_operand.hbm [shape: f32[16,128], index: 4, kind: output, shape index: {}]
  %s5 = sld [smem:[#allocation0]]
  $region59: #{tpu_custom_call.1} parent=0
    _
  %s7 = ssub.s32 1, %s5
  %s8 = scalar_select 0, %s7, %s5
  %9 = sst [smem:[#allocation5]] %s0
  %s11 = sshll.u32 %s1, 4
  %s12 = int_to_ptr.vmem [resolvable:$true] %s11
  %14 = dma.vmem_to_smem %s12, 16, [#allocation6], [#allocation4]
  %16 = dma.done [#allocation4], 16
  %17 = sfence
  $region1: #{tpu_custom_call.1} parent=0
    #allocation7 [shape = 'u8[4096]{0}', space=vmem, size = 0x1000, scoped, tag = 'input window, operand 3, single buffered']
    #allocation8 [shape = 's32[2]{0}', space=sflag, size = 0x8, scoped, tag = 'scoped memory for tpu_custom_call.1']
    #allocation9 [shape = 's32[2]{0}', space=sflag, size = 0x8, scoped, tag = 'scoped memory for tpu_custom_call.1']
    #allocation10 [shape = 'u8[8192]{0}', space=vmem, size = 0x2000, scoped, tag = 'output window, operand 0']
    %18 = vsyncpa [#allocation8], 0
    %19 = vsyncpa [#allocation9], 0
    %s20 = scalar_lea.sflag [#allocation9], 1
    %21 = vsyncpa %s20, 0
    loop: start=0, step=1, limit=4
    $region2: #{tpu_custom_call.1} parent=1 // loop_pre_header
      _
    $region3: #{tpu_custom_call.1} parent=1 // loop_header
      %s23 = sphi 0, %s27
      %p24 = scmp.ge.s32.totalorder %s23, 4
      %s31 = sphi 0, %s31
      %s33 = sphi 0, %s31
      %s34 = sphi 0, %s33
      %s48 = sphi 0, %s34
      %s54 = sphi 0, %s56
      %s57 = sphi 0, %s54
      %s58 = sphi 0, %s57
      %s74 = sphi 0, %s58
    $region4: #{tpu_custom_call.1} parent=1 // loop_header_branch
      %26 = sbr.rel (%p24) target = $region8
    $region5: #{tpu_custom_call.1} parent=1 // loop_body
      %s28 = ssub.s32 %s23, 1
      %s29 = ssub.s32 %s23, 2
      %s30 = sadd.s32 %s23, 1
      %s32 = sadd.s32 %s31, 1
      %p35 = scmp.eq.s32.totalorder %s23, 1
      %p36 = scmp.ne.s32.totalorder %s31, %s33
      %p37 = scmp.eq.s32.totalorder %s23, 0
      %p38 = por %p36, %p37
      %p39 = scmp.ne.s32.totalorder %s31, %s33
      %p40 = scmp.eq.s32.totalorder %s28, 1
      %p41 = por %p39, %p40
      %p42 = scmp.ne.s32.totalorder %s33, %s34
      %p43 = scmp.eq.s32.totalorder %s28, 0
      %p44 = por %p42, %p43
      %p45 = scmp.ne.s32.totalorder %s33, %s34
      %p46 = scmp.eq.s32.totalorder %s29, 1
      %p47 = por %p45, %p46
      %p49 = scmp.ne.s32.totalorder %s34, %s48
      %p50 = scmp.eq.s32.totalorder %s29, 0
      %p51 = por %p49, %p50
      %s52 = ssub.s32 %s23, %s30
      %p53 = scmp.eq.s32.totalorder %s52, 0
      %s55 = sadd.s32 %s54, 1
      %s56 = scalar_select %p53, %s54, %s55
      %p59 = pneg %p53
      %p60 = scmp.eq.s32.totalorder %s23, 1
      %p61 = por %p59, %p60
      %p62 = scmp.ne.s32.totalorder %s54, %s57
      %p63 = scmp.eq.s32.totalorder %s23, 0
      %p64 = por %p62, %p63
      %p65 = scmp.ne.s32.totalorder %s54, %s57
      %p66 = scmp.eq.s32.totalorder %s28, 1
      %p67 = por %p65, %p66
      %p68 = scmp.ne.s32.totalorder %s57, %s58
      %p69 = scmp.eq.s32.totalorder %s28, 0
      %p70 = por %p68, %p69
      %p71 = scmp.ne.s32.totalorder %s57, %s58
      %p72 = scmp.eq.s32.totalorder %s29, 1
      %p73 = por %p71, %p72
      %p75 = scmp.ne.s32.totalorder %s58, %s74
      %p76 = scmp.eq.s32.totalorder %s29, 0
      %p77 = por %p75, %p76
      %p78 = scmp.le.s32.totalorder 1, %s23
      %p79 = scmp.lt.s32.totalorder %s23, 3
      %p80 = pnand %p78, %p79
      %p81 = pneg %p80
      // Predicated region
      $region9: #{tpu_custom_call.1} parent=5 // pred_check
        _
      $region10: #{tpu_custom_call.1} parent=5 // pred_check_branch
        %83 = sbr.rel (%p80) target = $region12
      $region11: #{tpu_custom_call.1} parent=5 // pred_region
        %s84 = ssub.s32 %s23, 1
        // Predicated region
        $region13: #{tpu_custom_call.1} parent=11 // pred_check
          %p85 = pneg %p44
        $region14: #{tpu_custom_call.1} parent=11 // pred_check_branch
          %87 = sbr.rel (%p85) target = $region16
        $region15: #{tpu_custom_call.1} parent=11 // pred_region
          %89 = vsyncadd [#allocation8], 0
          %s91 = sshll.u32 %s3, 4
          %s92 = int_to_ptr.hbm [resolvable:$true] %s91
          %s93 = sshll.u32 [#allocation7], 4
          %s94 = int_to_ptr.vmem [resolvable:$true] %s93
          %96 = dma.hbm_to_vmem [thread:$0]  %s92, 128, %s94, [#allocation8]
        $region16: #{tpu_custom_call.1} parent=11 // pred_fallthru
          _
      $region12: #{tpu_custom_call.1} parent=5 // pred_fallthru
        _
      %p97 = scmp.lt.s32.totalorder %s23, 2
      // Predicated region
      $region17: #{tpu_custom_call.1} parent=5 // pred_check
        %p98 = pneg %p97
      $region18: #{tpu_custom_call.1} parent=5 // pred_check_branch
        %100 = sbr.rel (%p98) target = $region20
      $region19: #{tpu_custom_call.1} parent=5 // pred_region
        _
      $region20: #{tpu_custom_call.1} parent=5 // pred_fallthru
        _
      %p101 = scmp.le.s32.totalorder 1, %s23
      %p102 = scmp.lt.s32.totalorder %s23, 3
      %p103 = pnand %p101, %p102
      %p104 = pneg %p103
      // Predicated region
      $region21: #{tpu_custom_call.1} parent=5 // pred_check
        _
      $region22: #{tpu_custom_call.1} parent=5 // pred_check_branch
        %106 = sbr.rel (%p103) target = $region24
      $region23: #{tpu_custom_call.1} parent=5 // pred_region
        %s107 = ssub.s32 %s23, 1
        // Predicated region
        $region25: #{tpu_custom_call.1} parent=23 // pred_check
          %p108 = pneg %p44
        $region26: #{tpu_custom_call.1} parent=23 // pred_check_branch
          %110 = sbr.rel (%p108) target = $region28
        $region27: #{tpu_custom_call.1} parent=23 // pred_region
          %112 = dma.done [#allocation8], 128
        $region28: #{tpu_custom_call.1} parent=23 // pred_fallthru
          _
        %p113 = pneg %p44
        %p114 = pneg %p41
        %p115 = pneg %p70
        %p116 = pneg %p67
        %s117 = sand.u32 %s57, 1
        %s118 = scalar_lea.sflag [#allocation9], %s117
        %s119 = sand.u32 %s57, 1
        %s120 = smul.addr %s119, 8
        %s121 = scalar_lea.vmem [#allocation10], %s120
        %s122 = smul.u32 %s28, 8
        loop: start=0, step=1, limit=8
        $region29: #{tpu_custom_call.1} parent=23 // loop_pre_header
          _
        $region30: #{tpu_custom_call.1} parent=23 // loop_header
          %s124 = sphi 0, %s128
          %p125 = scmp.ge.s32.totalorder %s124, 8
        $region31: #{tpu_custom_call.1} parent=23 // loop_header_branch
          %127 = sbr.rel (%p125) target = $region35
        $region32: #{tpu_custom_call.1} parent=23 // loop_body
          %s129 = sadd.s32 %s122, %s124
          %s130 = sld [smem:[#allocation6 + %s129]]
          %p131 = scmp.lt.s32.totalorder %s124, 0
          %s132 = ssub.s32 0, %s124
          %s133 = scalar_select %p131, %s132, %s124
          %s134 = sand.u32 %s133, 7
          %s135 = ssub.s32 0, %s134
          %s136 = scalar_select %p131, %s135, %s134
          %p137 = scmp.ne.s32.totalorder %s136, 0
          %p138 = scmp.lt.s32.totalorder %s136, 0
          %p139 = pnand %p138, %p137
          %p140 = pneg %p139
          %s141 = sadd.s32 %s136, 8
          %s142 = scalar_select %p140, %s141, %s136
          %s143 = scalar_lea.hbm %s2, %s130
          %s144 = scalar_lea.vmem [#allocation2], %s124
          %s145 = scalar_lea.sflag [#allocation3], %s142
          // Predicated region
          $region36: #{tpu_custom_call.1} parent=32 // pred_check
            _
          $region37: #{tpu_custom_call.1} parent=32 // pred_check_branch
            %147 = sbr.rel target = $region39
          $region38: #{tpu_custom_call.1} parent=32 // pred_region
            %148 = sst [smem:[#allocation13]] [#allocation12]
            %149 = sst [smem:[#allocation14]] [#allocation11]
          $region39: #{tpu_custom_call.1} parent=32 // pred_fallthru
            _
          %151 = shalt.err (0)
          %s153 = sshll.u32 %s143, 4
          %s154 = int_to_ptr.hbm [resolvable:$true] %s153
          %s155 = sshll.u32 %s144, 4
          %s156 = int_to_ptr.vmem [resolvable:$true] %s155
          %158 = dma.hbm_to_vmem [thread:$0]  %s154, 16, %s156, %s145
        $region33: #{tpu_custom_call.1} parent=23 // loop_footer
          %s128 = sadd.s32 1, %s124
        $region34: #{tpu_custom_call.1} parent=23 // loop_footer_branch
          %123 = sbr.rel target = $region30
        $region35: #{tpu_custom_call.1} parent=23 // loop_exit
          _
        loop: start=0, step=1, limit=8
        $region40: #{tpu_custom_call.1} parent=23 // loop_pre_header
          _
        $region41: #{tpu_custom_call.1} parent=23 // loop_header
          %s160 = sphi 0, %s164
          %p161 = scmp.ge.s32.totalorder %s160, 8
        $region42: #{tpu_custom_call.1} parent=23 // loop_header_branch
          %163 = sbr.rel (%p161) target = $region46
        $region43: #{tpu_custom_call.1} parent=23 // loop_body
          %p165 = scmp.lt.s32.totalorder %s160, 0
          %s166 = ssub.s32 0, %s160
          %s167 = scalar_select %p165, %s166, %s160
          %s168 = sand.u32 %s167, 7
          %s169 = ssub.s32 0, %s168
          %s170 = scalar_select %p165, %s169, %s168
          %p171 = scmp.ne.s32.totalorder %s170, 0
          %p172 = scmp.lt.s32.totalorder %s170, 0
          %p173 = pnand %p172, %p171
          %p174 = pneg %p173
          %s175 = sadd.s32 %s170, 8
          %s176 = scalar_select %p174, %s175, %s170
          %s177 = scalar_lea.sflag [#allocation3], %s176
          %s178 = smul.u32 1, 1
          %s179 = sshll.u32 %s178, 4
          %180 = dma.done %s177, %s179
        $region44: #{tpu_custom_call.1} parent=23 // loop_footer
          %s164 = sadd.s32 1, %s160
        $region45: #{tpu_custom_call.1} parent=23 // loop_footer_branch
          %159 = sbr.rel target = $region41
        $region46: #{tpu_custom_call.1} parent=23 // loop_exit
          _
        %v181 = vld [vmem:[#allocation2] sm:$0xff]
        %v182 = vld [vmem:[#allocation7] sm:$0xff]
        %v183 = vadd.f32 %v181, %v182
        %184 = vst [vmem:[%s121] sm:$0xff] %v183
        %s185 = sand.u32 %s57, 1
        %s186 = scalar_lea.sflag [#allocation9], %s185
        %s187 = sand.u32 %s57, 1
        %s188 = smul.addr %s187, 8
        %s189 = scalar_lea.vmem [#allocation10], %s188
        // Predicated region
        $region47: #{tpu_custom_call.1} parent=23 // pred_check
          %p190 = pneg %p67
        $region48: #{tpu_custom_call.1} parent=23 // pred_check_branch
          %192 = sbr.rel (%p190) target = $region50
        $region49: #{tpu_custom_call.1} parent=23 // pred_region
          %194 = vsyncadd %s186, 0
          %s195 = smul.addr %s28, 8
          %s196 = scalar_lea.hbm %s4, %s195
          %s198 = sshll.u32 %s189, 4
          %s199 = int_to_ptr.vmem [resolvable:$true] %s198
          %s200 = sshll.u32 %s196, 4
          %s201 = int_to_ptr.hbm [resolvable:$true] %s200
          %203 = dma.vmem_to_hbm [thread:$0]  %s199, 128, %s201, %s186
        $region50: #{tpu_custom_call.1} parent=23 // pred_fallthru
          _
      $region24: #{tpu_custom_call.1} parent=5 // pred_fallthru
        _
      %p204 = scmp.le.s32.totalorder 2, %s23
      // Predicated region
      $region51: #{tpu_custom_call.1} parent=5 // pred_check
        %p205 = pneg %p204
      $region52: #{tpu_custom_call.1} parent=5 // pred_check_branch
        %207 = sbr.rel (%p205) target = $region54
      $region53: #{tpu_custom_call.1} parent=5 // pred_region
        %s208 = ssub.s32 %s23, 2
        // Predicated region
        $region55: #{tpu_custom_call.1} parent=53 // pred_check
          %p209 = pneg %p73
        $region56: #{tpu_custom_call.1} parent=53 // pred_check_branch
          %211 = sbr.rel (%p209) target = $region58
        $region57: #{tpu_custom_call.1} parent=53 // pred_region
          %s212 = sand.u32 %s58, 1
          %s213 = scalar_lea.sflag [#allocation9], %s212
          %s214 = sand.u32 %s58, 1
          %s215 = smul.addr %s214, 8
          %s216 = scalar_lea.vmem [#allocation10], %s215
          %218 = dma.done %s213, 128
        $region58: #{tpu_custom_call.1} parent=53 // pred_fallthru
          _
      $region54: #{tpu_custom_call.1} parent=5 // pred_fallthru
        _
    $region6: #{tpu_custom_call.1} parent=1 // loop_footer
      %s27 = sadd.s32 1, %s23
    $region7: #{tpu_custom_call.1} parent=1 // loop_footer_branch
      %22 = sbr.rel target = $region3
    $region8: #{tpu_custom_call.1} parent=1 // loop_exit
      _
    %219 = vsyncpa [#allocation8], 1
    %s220 = scalar_lea.sflag [#allocation8], 1
    %221 = vsyncpa %s220, 1
    %222 = vsyncpa [#allocation9], 1
    %s223 = scalar_lea.sflag [#allocation9], 1
    %224 = vsyncpa %s223, 1
  %225 = vsyncmov [#allocation3]
  %s226 = vpop.sfrf %225
  %p227 = scmp.eq.s32.totalorder %s226, 0
  %p228 = pneg %p227
  %230 = shalt.err (%p228)
  %s231 = scalar_lea.sflag [#allocation3], 1
  %232 = vsyncmov %s231
  %s233 = vpop.sfrf %232
  %p234 = scmp.eq.s32.totalorder %s233, 0
  %p235 = pneg %p234
  %237 = shalt.err (%p235)
  %s238 = scalar_lea.sflag [#allocation3], 2
  %239 = vsyncmov %s238
  %s240 = vpop.sfrf %239
  %p241 = scmp.eq.s32.totalorder %s240, 0
  %p242 = pneg %p241
  %244 = shalt.err (%p242)
  %s245 = scalar_lea.sflag [#allocation3], 3
  %246 = vsyncmov %s245
  %s247 = vpop.sfrf %246
  %p248 = scmp.eq.s32.totalorder %s247, 0
  %p249 = pneg %p248
  %251 = shalt.err (%p249)
  %s252 = scalar_lea.sflag [#allocation3], 4
  %253 = vsyncmov %s252
  %s254 = vpop.sfrf %253
  %p255 = scmp.eq.s32.totalorder %s254, 0
  %p256 = pneg %p255
  %258 = shalt.err (%p256)
  %s259 = scalar_lea.sflag [#allocation3], 5
  %260 = vsyncmov %s259
  %s261 = vpop.sfrf %260
  %p262 = scmp.eq.s32.totalorder %s261, 0
  %p263 = pneg %p262
  %265 = shalt.err (%p263)
  %s266 = scalar_lea.sflag [#allocation3], 6
  %267 = vsyncmov %s266
  %s268 = vpop.sfrf %267
  %p269 = scmp.eq.s32.totalorder %s268, 0
  %p270 = pneg %p269
  %272 = shalt.err (%p270)
  %s273 = scalar_lea.sflag [#allocation3], 7
  %274 = vsyncmov %s273
  %s275 = vpop.sfrf %274
  %p276 = scmp.eq.s32.totalorder %s275, 0
  %p277 = pneg %p276
  %279 = shalt.err (%p277)

</llo_original>
